<compile_context>
chip_gen: v7x
topology: tpu7x:2x2x1
jax: 0.10.0
libtpu: 0.0.40
codegen_flags: <defaults>
</compile_context>

<pallas_src>
import jax
import jax.numpy as jnp
from jax.experimental import pallas as pl
from jax.experimental.pallas import tpu as pltpu

LOG_STD_MIN = -20.0
LOG_STD_MAX = 2.0

_SUBLANE = 16  # lcm of f32 (8) and bf16 (16) sublane tiling


def _round_up(x, m):
    return ((x + m - 1) // m) * m


def policy_net_kernel(x_ref, w1_ref, b1_ref, w2_ref, b2_ref, wh_ref, bh_ref,
                      lo_ref, hi_ref, out_ref):
    """One batch tile: two hidden layers + fused (mean|log_std|pad) head."""
    x = x_ref[...].astype(jnp.bfloat16)

    # linear1 + relu  (bf16 operands, f32 accumulation, f32 bias add)
    h1 = jnp.dot(x, w1_ref[...], preferred_element_type=jnp.float32) + b1_ref[...]
    h1 = jnp.maximum(h1, 0.0).astype(jnp.bfloat16)

    # linear2 + relu
    h2 = jnp.dot(h1, w2_ref[...], preferred_element_type=jnp.float32) + b2_ref[...]
    h2 = jnp.maximum(h2, 0.0).astype(jnp.bfloat16)

    # fused heads: columns [0, A) = mean, [A, 2A) = log_std, rest = zero pad.
    heads = jnp.dot(h2, wh_ref[...], preferred_element_type=jnp.float32) + bh_ref[...]

    # per-column clamp via resident lo/hi rows: mean columns get (-big, +big)
    # (no-op), log_std / pad columns get (LOG_STD_MIN, LOG_STD_MAX).
    out = jnp.minimum(jnp.maximum(heads, lo_ref[...]), hi_ref[...])
    out_ref[...] = out.astype(out_ref.dtype)


def prepare_policy_params(params):
    """One-time layout/dtype plumbing: fused bf16 head weights, clamp rows."""
    n_actions = params["wm"].shape[1]
    P = _round_up(max(2 * n_actions, 128), 128)  # lane-dense output width

    wh = jnp.concatenate([params["wm"], params["ws"]], axis=1)
    wh = jnp.pad(wh, ((0, 0), (0, P - 2 * n_actions)))
    bh = jnp.concatenate([params["bm"], params["bs"]], axis=1)
    bh = jnp.pad(bh, ((0, 0), (0, P - 2 * n_actions)))

    is_logstd = jnp.arange(P) >= n_actions  # clamping the zero pad is harmless
    lo = jnp.where(is_logstd, LOG_STD_MIN, -3.0e38).astype(jnp.float32)[None, :]
    hi = jnp.where(is_logstd, LOG_STD_MAX, 3.0e38).astype(jnp.float32)[None, :]

    return {
        "w1": params["w1"].astype(jnp.bfloat16),
        "b1": params["b1"].astype(jnp.float32),
        "w2": params["w2"].astype(jnp.bfloat16),
        "b2": params["b2"].astype(jnp.float32),
        "wh": wh.astype(jnp.bfloat16),
        "bh": bh.astype(jnp.float32),
        "lo": lo,
        "hi": hi,
        "n_actions": n_actions,
        "P": P,
    }


def policy_net_forward(state, prep, *, tb_max=2048):
    """state: (B, n_states) float32; prep: dict from prepare_policy_params.

    Returns (mean, log_std), each (B, n_actions) float32.
    """
    B, n_states = state.shape
    hidden_dim = prep["w1"].shape[1]
    n_actions = prep["n_actions"]
    P = prep["P"]

    # ---- waste-aware batch tiling --------------------------------------
    # At least 2 grid steps for moderate B so the parallel batch axis can be
    # split across TensorCores (v7x megacore); harmless (~0.35us) elsewhere.
    min_tiles = 2 if B >= 2 * _SUBLANE else 1
    num_tiles = max(min_tiles, pl.cdiv(B, tb_max))
    TB = _round_up(pl.cdiv(B, num_tiles), _SUBLANE)
    B_pad = _round_up(B, TB)
    x = jnp.pad(state, ((0, B_pad - B), (0, 0))) if B_pad != B else state
    grid = (B_pad // TB,)

    consts = (prep["w1"], prep["b1"], prep["w2"], prep["b2"],
              prep["wh"], prep["bh"], prep["lo"], prep["hi"])

    # x tiles walk the batch; constant-index weights stay resident and are
    # single-buffered (double-buffering a never-changing block wastes VMEM).
    def const_spec(a):
        return pl.BlockSpec(a.shape, lambda i: (0, 0),
                            pipeline_mode=pl.Buffered(buffer_count=1))

    in_specs = [pl.BlockSpec((TB, n_states), lambda i: (i, 0))] + \
               [const_spec(a) for a in consts]
    out_specs = pl.BlockSpec((TB, P), lambda i: (i, 0))
    out_shape = jax.ShapeDtypeStruct((B_pad, P), jnp.bfloat16)

    # ---- VMEM budget (single-buffered consts + double-buffered x/out) --
    const_bytes = sum(int(a.size) * a.dtype.itemsize for a in consts)
    x_tile_bytes = 2 * TB * n_states * 4          # double-buffered f32 input
    out_tile_bytes = 2 * TB * P * 2               # double-buffered bf16 output
    work_bytes = TB * (2 * hidden_dim + 2 * P) * 4  # f32 intermediates (rough)
    est = const_bytes + x_tile_bytes + out_tile_bytes + work_bytes
    vmem_limit = int(min(max(2 * est, 32 << 20), 64 << 20))

    flops = 2 * B_pad * (n_states * hidden_dim
                         + hidden_dim * hidden_dim
                         + hidden_dim * P)
    bytes_accessed = x.size * 4 + const_bytes + B_pad * P * 2

    out = pl.pallas_call(
        policy_net_kernel,
        out_shape=out_shape,
        grid=grid,
        in_specs=in_specs,
        out_specs=out_specs,
        compiler_params=pltpu.CompilerParams(
            dimension_semantics=("parallel",),
            vmem_limit_bytes=vmem_limit),
        cost_estimate=pl.CostEstimate(flops=flops, transcendentals=0,
                                      bytes_accessed=bytes_accessed),
    )(x, *consts)

    mean = out[:B, :n_actions].astype(jnp.float32)
    log_std = out[:B, n_actions:2 * n_actions].astype(jnp.float32)
    return mean, log_std


def init_policy_net_params(key, n_states, n_actions, hidden_dim, init_w=0.003):
    """Deterministic init mirroring the PyTorch module's __init__ shapes.

    linear1/linear2 use the default nn.Linear init (U[-1/sqrt(fan_in), +]);
    mean/log_std heads use U[-init_w, init_w]. Weights stored as (in, out).
    """
    k = jax.random.split(key, 8)
    lim1 = 1.0 / jnp.sqrt(n_states)
    lim2 = 1.0 / jnp.sqrt(hidden_dim)
    return {
        "w1": jax.random.uniform(k[0], (n_states, hidden_dim), jnp.float32, -lim1, lim1),
        "b1": jax.random.uniform(k[1], (1, hidden_dim), jnp.float32, -lim1, lim1),
        "w2": jax.random.uniform(k[2], (hidden_dim, hidden_dim), jnp.float32, -lim2, lim2),
        "b2": jax.random.uniform(k[3], (1, hidden_dim), jnp.float32, -lim2, lim2),
        "wm": jax.random.uniform(k[4], (hidden_dim, n_actions), jnp.float32, -init_w, init_w),
        "bm": jax.random.uniform(k[5], (1, n_actions), jnp.float32, -init_w, init_w),
        "ws": jax.random.uniform(k[6], (hidden_dim, n_actions), jnp.float32, -init_w, init_w),
        "bs": jax.random.uniform(k[7], (1, n_actions), jnp.float32, -init_w, init_w),
    }


if __name__ == "__main__":
    key = jax.random.PRNGKey(0)
    batch, n_states, n_actions, hidden_dim = 2, 8, 4, 32

    pkey, skey = jax.random.split(key)
    params = init_policy_net_params(pkey, n_states, n_actions, hidden_dim)
    prep = prepare_policy_params(params)
    state = jax.random.normal(skey, (batch, n_states), jnp.float32)

    mean, log_std = policy_net_forward(state, prep)
    jax.block_until_ready((mean, log_std))

    # Pure-JAX f32 reference (kernel uses bf16 matmul operands -> loose tol).
    def ref_forward(s):
        h1 = jnp.maximum(s @ params["w1"] + params["b1"], 0.0)
        h2 = jnp.maximum(h1 @ params["w2"] + params["b2"], 0.0)
        m = h2 @ params["wm"] + params["bm"]
        ls = jnp.clip(h2 @ params["ws"] + params["bs"], LOG_STD_MIN, LOG_STD_MAX)
        return m, ls

    mean_ref, logstd_ref = ref_forward(state)
    assert mean.shape == (batch, n_actions) and log_std.shape == (batch, n_actions)
    assert jnp.allclose(mean, mean_ref, atol=1e-2, rtol=1e-2), "mean mismatch"
    assert jnp.allclose(log_std, logstd_ref, atol=1e-2, rtol=1e-2), "log_std mismatch"

    # Larger ragged batch covers the multi-step (>=2 tiles) padded path.
    big_state = jax.random.normal(jax.random.PRNGKey(1), (1000, n_states), jnp.float32)
    mean_b, logstd_b = policy_net_forward(big_state, prep)
    jax.block_until_ready((mean_b, logstd_b))
    mean_rb, logstd_rb = ref_forward(big_state)
    assert jnp.allclose(mean_b, mean_rb, atol=1e-2, rtol=1e-2), "big-batch mean mismatch"
    assert jnp.allclose(logstd_b, logstd_rb, atol=1e-2, rtol=1e-2), "big-batch log_std mismatch"

    print("KERNEL_OK")
</pallas_src>

<mosaic_0001>
module attributes {stable_mosaic.version = 11 : i64} {
  func.func @policy_net_kernel(%arg0: i32, %arg1: memref<16x8xf32, #tpu.memory_space<vmem>>, %arg2: memref<8x32xbf16, #tpu.memory_space<vmem>>, %arg3: memref<1x32xf32, #tpu.memory_space<vmem>>, %arg4: memref<32x32xbf16, #tpu.memory_space<vmem>>, %arg5: memref<1x32xf32, #tpu.memory_space<vmem>>, %arg6: memref<32x128xbf16, #tpu.memory_space<vmem>>, %arg7: memref<1x128xf32, #tpu.memory_space<vmem>>, %arg8: memref<1x128xf32, #tpu.memory_space<vmem>>, %arg9: memref<1x128xf32, #tpu.memory_space<vmem>>, %arg10: memref<16x128xbf16, #tpu.memory_space<vmem>>) attributes {dimension_semantics = [#tpu.dimension_semantics<parallel>], iteration_bounds = array<i64: 1>, scalar_prefetch = 0 : i64, scratch_operands = 0 : i64, tpu.core_type = #tpu.core_type<tc>, window_params = [{transform_indices = @transform_0, window_bounds = array<i64: 16, 8>}, {pipeline_mode = #tpu.pipeline_mode<synchronous>, transform_indices = @transform_1, window_bounds = array<i64: 8, 32>}, {pipeline_mode = #tpu.pipeline_mode<synchronous>, transform_indices = @transform_2, window_bounds = array<i64: 1, 32>}, {pipeline_mode = #tpu.pipeline_mode<synchronous>, transform_indices = @transform_3, window_bounds = array<i64: 32, 32>}, {pipeline_mode = #tpu.pipeline_mode<synchronous>, transform_indices = @transform_4, window_bounds = array<i64: 1, 32>}, {pipeline_mode = #tpu.pipeline_mode<synchronous>, transform_indices = @transform_5, window_bounds = array<i64: 32, 128>}, {pipeline_mode = #tpu.pipeline_mode<synchronous>, transform_indices = @transform_6, window_bounds = array<i64: 1, 128>}, {pipeline_mode = #tpu.pipeline_mode<synchronous>, transform_indices = @transform_7, window_bounds = array<i64: 1, 128>}, {pipeline_mode = #tpu.pipeline_mode<synchronous>, transform_indices = @transform_8, window_bounds = array<i64: 1, 128>}, {transform_indices = @transform_9, window_bounds = array<i64: 16, 128>}]} {
    %c0 = arith.constant 0 : index
    %c0_0 = arith.constant 0 : index
    %0 = vector.load %arg1[%c0, %c0_0] : memref<16x8xf32, #tpu.memory_space<vmem>>, vector<16x8xf32>
    %1 = arith.truncf %0 : vector<16x8xf32> to vector<16x8xbf16>
    %c0_1 = arith.constant 0 : index
    %c0_2 = arith.constant 0 : index
    %2 = vector.load %arg2[%c0_1, %c0_2] : memref<8x32xbf16, #tpu.memory_space<vmem>>, vector<8x32xbf16>
    %cst = arith.constant dense<0.000000e+00> : vector<16x32xf32>
    %3 = tpu.matmul %1, %2, %cst {dimension_numbers = #tpu.dot_dimension_numbers<[1], [0], [0], [1], [0, 0, 1, 1], [], []>} : vector<16x8xbf16>, vector<8x32xbf16>, vector<16x32xf32> -> vector<16x32xf32>
    %c0_3 = arith.constant 0 : index
    %c0_4 = arith.constant 0 : index
    %4 = vector.load %arg3[%c0_3, %c0_4] : memref<1x32xf32, #tpu.memory_space<vmem>>, vector<1x32xf32>
    %5 = vector.broadcast %4 : vector<1x32xf32> to vector<16x32xf32>
    %6 = arith.addf %3, %5 : vector<16x32xf32>
    %cst_5 = arith.constant 0.000000e+00 : f32
    %7 = vector.broadcast %cst_5 : f32 to vector<16x32xf32>
    %8 = arith.maximumf %6, %7 : vector<16x32xf32>
    %9 = arith.truncf %8 : vector<16x32xf32> to vector<16x32xbf16>
    %c0_6 = arith.constant 0 : index
    %c0_7 = arith.constant 0 : index
    %10 = vector.load %arg4[%c0_6, %c0_7] : memref<32x32xbf16, #tpu.memory_space<vmem>>, vector<32x32xbf16>
    %cst_8 = arith.constant dense<0.000000e+00> : vector<16x32xf32>
    %11 = tpu.matmul %9, %10, %cst_8 {dimension_numbers = #tpu.dot_dimension_numbers<[1], [0], [0], [1], [0, 0, 1, 1], [], []>} : vector<16x32xbf16>, vector<32x32xbf16>, vector<16x32xf32> -> vector<16x32xf32>
    %c0_9 = arith.constant 0 : index
    %c0_10 = arith.constant 0 : index
    %12 = vector.load %arg5[%c0_9, %c0_10] : memref<1x32xf32, #tpu.memory_space<vmem>>, vector<1x32xf32>
    %13 = vector.broadcast %12 : vector<1x32xf32> to vector<16x32xf32>
    %14 = arith.addf %11, %13 : vector<16x32xf32>
    %cst_11 = arith.constant 0.000000e+00 : f32
    %15 = vector.broadcast %cst_11 : f32 to vector<16x32xf32>
    %16 = arith.maximumf %14, %15 : vector<16x32xf32>
    %17 = arith.truncf %16 : vector<16x32xf32> to vector<16x32xbf16>
    %c0_12 = arith.constant 0 : index
    %c0_13 = arith.constant 0 : index
    %18 = vector.load %arg6[%c0_12, %c0_13] : memref<32x128xbf16, #tpu.memory_space<vmem>>, vector<32x128xbf16>
    %cst_14 = arith.constant dense<0.000000e+00> : vector<16x128xf32>
    %19 = tpu.matmul %17, %18, %cst_14 {dimension_numbers = #tpu.dot_dimension_numbers<[1], [0], [0], [1], [0, 0, 1, 1], [], []>} : vector<16x32xbf16>, vector<32x128xbf16>, vector<16x128xf32> -> vector<16x128xf32>
    %c0_15 = arith.constant 0 : index
    %c0_16 = arith.constant 0 : index
    %20 = vector.load %arg7[%c0_15, %c0_16] : memref<1x128xf32, #tpu.memory_space<vmem>>, vector<1x128xf32>
    %21 = vector.broadcast %20 : vector<1x128xf32> to vector<16x128xf32>
    %22 = arith.addf %19, %21 : vector<16x128xf32>
    %c0_17 = arith.constant 0 : index
    %c0_18 = arith.constant 0 : index
    %23 = vector.load %arg8[%c0_17, %c0_18] : memref<1x128xf32, #tpu.memory_space<vmem>>, vector<1x128xf32>
    %24 = vector.broadcast %23 : vector<1x128xf32> to vector<16x128xf32>
    %25 = arith.maximumf %22, %24 : vector<16x128xf32>
    %c0_19 = arith.constant 0 : index
    %c0_20 = arith.constant 0 : index
    %26 = vector.load %arg9[%c0_19, %c0_20] : memref<1x128xf32, #tpu.memory_space<vmem>>, vector<1x128xf32>
    %27 = vector.broadcast %26 : vector<1x128xf32> to vector<16x128xf32>
    %28 = arith.minimumf %25, %27 : vector<16x128xf32>
    %29 = arith.truncf %28 : vector<16x128xf32> to vector<16x128xbf16>
    %c0_21 = arith.constant 0 : index
    %c0_22 = arith.constant 0 : index
    %30 = vector.load %arg10[%c0_21, %c0_22] : memref<16x128xbf16, #tpu.memory_space<vmem>>, vector<16x128xbf16>
    tpu.vector_store %arg10[%c0_21, %c0_22], %29 {strides = array<i32>} : memref<16x128xbf16, #tpu.memory_space<vmem>>, vector<16x128xbf16>,
    return
  }
  func.func @transform_0(%arg0: i32) -> (i32, i32) {
    %c0_i32 = arith.constant 0 : i32
    %c0_i32_0 = arith.constant 0 : i32
    return %arg0, %c0_i32 : i32, i32
  }
  func.func @transform_1(%arg0: i32) -> (i32, i32) {
    %c0_i32 = arith.constant 0 : i32
    %c0_i32_0 = arith.constant 0 : i32
    %c0_i32_1 = arith.constant 0 : i32
    return %c0_i32, %c0_i32_0 : i32, i32
  }
  func.func @transform_2(%arg0: i32) -> (i32, i32) {
    %c0_i32 = arith.constant 0 : i32
    %c0_i32_0 = arith.constant 0 : i32
    %c0_i32_1 = arith.constant 0 : i32
    return %c0_i32, %c0_i32_0 : i32, i32
  }
  func.func @transform_3(%arg0: i32) -> (i32, i32) {
    %c0_i32 = arith.constant 0 : i32
    %c0_i32_0 = arith.constant 0 : i32
    %c0_i32_1 = arith.constant 0 : i32
    return %c0_i32, %c0_i32_0 : i32, i32
  }
  func.func @transform_4(%arg0: i32) -> (i32, i32) {
    %c0_i32 = arith.constant 0 : i32
    %c0_i32_0 = arith.constant 0 : i32
    %c0_i32_1 = arith.constant 0 : i32
    return %c0_i32, %c0_i32_0 : i32, i32
  }
  func.func @transform_5(%arg0: i32) -> (i32, i32) {
    %c0_i32 = arith.constant 0 : i32
    %c0_i32_0 = arith.constant 0 : i32
    %c0_i32_1 = arith.constant 0 : i32
    return %c0_i32, %c0_i32_0 : i32, i32
  }
  func.func @transform_6(%arg0: i32) -> (i32, i32) {
    %c0_i32 = arith.constant 0 : i32
    %c0_i32_0 = arith.constant 0 : i32
    %c0_i32_1 = arith.constant 0 : i32
    return %c0_i32, %c0_i32_0 : i32, i32
  }
  func.func @transform_7(%arg0: i32) -> (i32, i32) {
    %c0_i32 = arith.constant 0 : i32
    %c0_i32_0 = arith.constant 0 : i32
    %c0_i32_1 = arith.constant 0 : i32
    return %c0_i32, %c0_i32_0 : i32, i32
  }
  func.func @transform_8(%arg0: i32) -> (i32, i32) {
    %c0_i32 = arith.constant 0 : i32
    %c0_i32_0 = arith.constant 0 : i32
    %c0_i32_1 = arith.constant 0 : i32
    return %c0_i32, %c0_i32_0 : i32, i32
  }
  func.func @transform_9(%arg0: i32) -> (i32, i32) {
    %c0_i32 = arith.constant 0 : i32
    %c0_i32_0 = arith.constant 0 : i32
    return %arg0, %c0_i32 : i32, i32
  }
}

</mosaic_0001>

<llo_original>
// kernel: tpu_custom_call.1
$region0: #{tpu_custom_call.1}
  #allocation0 [shape = 'u32[]', space=smem, size = 0x4, offset = 0x4, fixed_abs, tag = 'smem constant byte address 0x4 - core index']
  #allocation1 [shape = 'u32[144,128]{1,0:T(1,128)}', space=vmem, size = 0x12000, scoped, tag = 'internal scratch']
  %s0 = inlined_call_operand.vmem [shape: f32[16,8], index: 0, kind: input, shape index: {}]
  %s1 = inlined_call_operand.hbm [shape: bf16[8,32], index: 1, kind: input, shape index: {}]
  %s2 = inlined_call_operand.vmem [shape: f32[1,32], index: 2, kind: input, shape index: {}]
  %s3 = inlined_call_operand.vmem [shape: bf16[32,32], index: 3, kind: input, shape index: {}]
  %s4 = inlined_call_operand.vmem [shape: f32[1,32], index: 4, kind: input, shape index: {}]
  %s5 = inlined_call_operand.vmem [shape: bf16[32,128], index: 5, kind: input, shape index: {}]
  %s6 = inlined_call_operand.vmem [shape: f32[1,128], index: 6, kind: input, shape index: {}]
  %s7 = inlined_call_operand.vmem [shape: f32[1,128], index: 7, kind: input, shape index: {}]
  %s8 = inlined_call_operand.vmem [shape: f32[1,128], index: 8, kind: input, shape index: {}]
  %s9 = inlined_call_operand.hbm [shape: bf16[16,128], index: 9, kind: output, shape index: {}]
  %s10 = sld [smem:[#allocation0]]
  $region50: #{tpu_custom_call.1} parent=0
    _
  %s12 = ssub.s32 1, %s10
  %s13 = scalar_select 0, %s12, %s10
  $region1: #{tpu_custom_call.1} parent=0
    #allocation2 [shape = 'u8[2048]{0}', space=vmem, size = 0x800, scoped, tag = 'input window, operand 1, single buffered']
    #allocation3 [shape = 's32[1]{0}', space=sflag, size = 0x4, scoped, tag = 'scoped memory for tpu_custom_call.1']
    #allocation4 [shape = 's32[1]{0}', space=sflag, size = 0x4, scoped, tag = 'scoped memory for tpu_custom_call.1']
    #allocation5 [shape = 'u8[4096]{0}', space=vmem, size = 0x1000, scoped, tag = 'output window, operand 0, single buffered']
    %14 = vsyncpa [#allocation3], 0
    %15 = vsyncpa [#allocation4], 0
    // Predicated region
    $region2: #{tpu_custom_call.1} parent=1 // pred_check
      _
    $region3: #{tpu_custom_call.1} parent=1 // pred_check_branch
      %17 = sbr.rel (0) target = $region5
    $region4: #{tpu_custom_call.1} parent=1 // pred_region
      _
    $region5: #{tpu_custom_call.1} parent=1 // pred_fallthru
      _
    // Predicated region
    $region6: #{tpu_custom_call.1} parent=1 // pred_check
      _
    $region7: #{tpu_custom_call.1} parent=1 // pred_check_branch
      %19 = sbr.rel (0) target = $region9
    $region8: #{tpu_custom_call.1} parent=1 // pred_region
      %s21 = ssub.s32 64, 64
      %22 = vsyncadd [#allocation3], %s21
      %s24 = sshll.u32 [#allocation2], 4
      %s25 = int_to_ptr.vmem [resolvable:$true] %s24
      %27 = dma.hbm_to_vmem [thread:$0]  %s1, 64, %s25, [#allocation3]
    $region9: #{tpu_custom_call.1} parent=1 // pred_fallthru
      _
    // Predicated region
    $region10: #{tpu_custom_call.1} parent=1 // pred_check
      _
    $region11: #{tpu_custom_call.1} parent=1 // pred_check_branch
      %29 = sbr.rel (0) target = $region13
    $region12: #{tpu_custom_call.1} parent=1 // pred_region
      _
    $region13: #{tpu_custom_call.1} parent=1 // pred_fallthru
      _
    // Predicated region
    $region14: #{tpu_custom_call.1} parent=1 // pred_check
      _
    $region15: #{tpu_custom_call.1} parent=1 // pred_check_branch
      %31 = sbr.rel (0) target = $region17
    $region16: #{tpu_custom_call.1} parent=1 // pred_region
      _
    $region17: #{tpu_custom_call.1} parent=1 // pred_fallthru
      _
    // Predicated region
    $region18: #{tpu_custom_call.1} parent=1 // pred_check
      _
    $region19: #{tpu_custom_call.1} parent=1 // pred_check_branch
      %33 = sbr.rel (0) target = $region21
    $region20: #{tpu_custom_call.1} parent=1 // pred_region
      _
    $region21: #{tpu_custom_call.1} parent=1 // pred_fallthru
      _
    // Predicated region
    $region22: #{tpu_custom_call.1} parent=1 // pred_check
      _
    $region23: #{tpu_custom_call.1} parent=1 // pred_check_branch
      %35 = sbr.rel (0) target = $region25
    $region24: #{tpu_custom_call.1} parent=1 // pred_region
      _
    $region25: #{tpu_custom_call.1} parent=1 // pred_fallthru
      _
    // Predicated region
    $region26: #{tpu_custom_call.1} parent=1 // pred_check
      _
    $region27: #{tpu_custom_call.1} parent=1 // pred_check_branch
      %37 = sbr.rel (0) target = $region29
    $region28: #{tpu_custom_call.1} parent=1 // pred_region
      _
    $region29: #{tpu_custom_call.1} parent=1 // pred_fallthru
      _
    // Predicated region
    $region30: #{tpu_custom_call.1} parent=1 // pred_check
      _
    $region31: #{tpu_custom_call.1} parent=1 // pred_check_branch
      %39 = sbr.rel (0) target = $region33
    $region32: #{tpu_custom_call.1} parent=1 // pred_region
      _
    $region33: #{tpu_custom_call.1} parent=1 // pred_fallthru
      _
    // Predicated region
    $region34: #{tpu_custom_call.1} parent=1 // pred_check
      _
    $region35: #{tpu_custom_call.1} parent=1 // pred_check_branch
      %41 = sbr.rel (0) target = $region37
    $region36: #{tpu_custom_call.1} parent=1 // pred_region
      _
    $region37: #{tpu_custom_call.1} parent=1 // pred_fallthru
      _
    // Predicated region
    $region38: #{tpu_custom_call.1} parent=1 // pred_check
      _
    $region39: #{tpu_custom_call.1} parent=1 // pred_check_branch
      %43 = sbr.rel (0) target = $region41
    $region40: #{tpu_custom_call.1} parent=1 // pred_region
      %44 = dma.done [#allocation3], 64
    $region41: #{tpu_custom_call.1} parent=1 // pred_fallthru
      _
    %v46 = vld [vmem:[%s0] sm:$0xff]
    %v47 = vld [vmem:[%s0 + $0x8] sm:$0xff]
    %v48 = vpack.c.bf16 %v47, %v46
    %v49 = vld [vmem:[#allocation2] sm:$0xf]
    %v50 = vld [vmem:[%s2] sm:$0x1]
    %v52 = vlaneseq
    %v53 = vshrl.u32 %v52, 7
    %v54 = vsub.s32 0, %v53
    %v55 = vrot.slane %v50, %v54
    %vm57 = vcmask 64512
    %v59 = vsel %vm57, %v48, 0
    %vm61 = vcmask 1043456
    %v63 = vsel %vm61, %v49, 0
    %65 = vmatprep.subr.bf16.mxu0 0
    %66 = vmatpush1.bf16.msra.mxu0 %v63
    %67 = vmatprep.subr.bf16.mxu0 0
    %68 = vmatpush1.bf16.msra.mxu0 0
    %69 = vmatprep.subr.bf16.mxu0 0
    %70 = vmatpush1.bf16.msra.mxu0 0
    %71 = vmatprep.subr.bf16.mxu0 0
    %72 = vmatpush1.bf16.msra.mxu0 0
    %73 = vmatprep.subr.bf16.mxu0 0
    %74 = vmatpush1.bf16.msra.mxu0 0
    %75 = vmatprep.subr.bf16.mxu0 0
    %76 = vmatpush1.bf16.msra.mxu0 0
    %77 = vmatprep.subr.bf16.mxu0 0
    %78 = vmatpush1.bf16.msra.mxu0 0
    %79 = vmatprep.subr.bf16.mxu0 0
    %80 = vmatpush1.bf16.msra.mxu0 0
    %81 = vmatprep.subr.bf16.mxu0 0
    %82 = vmatpush1.bf16.msra.mxu0 0
    %83 = vmatprep.subr.bf16.mxu0 0
    %84 = vmatpush1.bf16.msra.mxu0 0
    %85 = vmatprep.subr.bf16.mxu0 0
    %86 = vmatpush1.bf16.msra.mxu0 0
    %87 = vmatprep.subr.bf16.mxu0 0
    %88 = vmatpush1.bf16.msra.mxu0 0
    %89 = vmatprep.subr.bf16.mxu0 0
    %90 = vmatpush1.bf16.msra.mxu0 0
    %91 = vmatprep.subr.bf16.mxu0 0
    %92 = vmatpush1.bf16.msra.mxu0 0
    %93 = vmatprep.subr.bf16.mxu0 0
    %94 = vmatpush1.bf16.msra.mxu0 0
    %95 = vmatprep.subr.bf16.mxu0 0
    %96 = vmatpush1.bf16.msra.mxu0 0
    %97 = vmatprep.mubr.bf16.mxu0 0
    %98 = vmatmul.mubr.bf16.gmra.mrb[0].mxu0 %v59
    %v99 = vpop.f32.mrb[0].mxu0
    %v100 = vadd.f32 %v55, %v99
    %v101 = vpop.f32.mrb[0].mxu0
    %v102 = vpop.f32.mrb[0].mxu0
    %v103 = vadd.f32 %v55, %v102
    %v104 = vpop.f32.mrb[0].mxu0
    %105 = vdwg.mxu0
    %v106 = vmax.f32 %v100, 0.0
    %v107 = vmax.f32 %v103, 0.0
    %v108 = vpack.c.bf16 %v107, %v106
    %v109 = vld [vmem:[%s3] sm:$0xf]
    %v110 = vld [vmem:[%s3 + $0x4] sm:$0xf]
    %v111 = vld [vmem:[%s3 + $0x8] sm:$0xf]
    %v112 = vld [vmem:[%s3 + $0xc] sm:$0xf]
    %v113 = vld [vmem:[%s4] sm:$0x1]
    %v115 = vlaneseq
    %v116 = vshrl.u32 %v115, 7
    %v117 = vsub.s32 0, %v116
    %v118 = vrot.slane %v113, %v117
    %v124 = vunpack.c.l.b16 %v109
    %v125 = vunpack.c.l.b16 %v110
    %v126 = vunpack.c.l.b16 %v111
    %v127 = vunpack.c.l.b16 %v112
    %v128 = vpack.c.b16 %v125, %v124
    %v129 = vpack.c.b16 %v127, %v126
    %vm132 = vcmask 261120
    %v134 = vsel %vm132, %v108, 0
    %136 = vmatprep.subr.bf16.mxu0 0
    %137 = vmatpush1.bf16.msra.mxu0 %v128
    %138 = vmatprep.subr.bf16.mxu0 0
    %139 = vmatpush1.bf16.msra.mxu0 %v129
    %140 = vmatprep.subr.bf16.mxu0 0
    %141 = vmatpush1.bf16.msra.mxu0 0
    %142 = vmatprep.subr.bf16.mxu0 0
    %143 = vmatpush1.bf16.msra.mxu0 0
    %144 = vmatprep.subr.bf16.mxu0 0
    %145 = vmatpush1.bf16.msra.mxu0 0
    %146 = vmatprep.subr.bf16.mxu0 0
    %147 = vmatpush1.bf16.msra.mxu0 0
    %148 = vmatprep.subr.bf16.mxu0 0
    %149 = vmatpush1.bf16.msra.mxu0 0
    %150 = vmatprep.subr.bf16.mxu0 0
    %151 = vmatpush1.bf16.msra.mxu0 0
    %152 = vmatprep.subr.bf16.mxu0 0
    %153 = vmatpush1.bf16.msra.mxu0 0
    %154 = vmatprep.subr.bf16.mxu0 0
    %155 = vmatpush1.bf16.msra.mxu0 0
    %156 = vmatprep.subr.bf16.mxu0 0
    %157 = vmatpush1.bf16.msra.mxu0 0
    %158 = vmatprep.subr.bf16.mxu0 0
    %159 = vmatpush1.bf16.msra.mxu0 0
    %160 = vmatprep.subr.bf16.mxu0 0
    %161 = vmatpush1.bf16.msra.mxu0 0
    %162 = vmatprep.subr.bf16.mxu0 0
    %163 = vmatpush1.bf16.msra.mxu0 0
    %164 = vmatprep.subr.bf16.mxu0 0
    %165 = vmatpush1.bf16.msra.mxu0 0
    %166 = vmatprep.subr.bf16.mxu0 0
    %167 = vmatpush1.bf16.msra.mxu0 0
    %168 = vmatprep.mubr.bf16.mxu0 0
    %169 = vmatmul.mubr.bf16.gmra.mrb[0].mxu0 %v134
    %v170 = vpop.f32.mrb[0].mxu0
    %v171 = vadd.f32 %v118, %v170
    %v172 = vpop.f32.mrb[0].mxu0
    %v173 = vpop.f32.mrb[0].mxu0
    %v174 = vadd.f32 %v118, %v173
    %v175 = vpop.f32.mrb[0].mxu0
    %176 = vdwg.mxu0
    %v177 = vmax.f32 %v171, 0.0
    %v178 = vmax.f32 %v174, 0.0
    %v179 = vpack.c.bf16 %v178, %v177
    %v180 = vld [vmem:[%s5] sm:$0xf]
    %v181 = vld [vmem:[%s5 + $0x4] sm:$0xf]
    %v182 = vld [vmem:[%s5 + $0x8] sm:$0xf]
    %v183 = vld [vmem:[%s5 + $0xc] sm:$0xf]
    %v184 = vld [vmem:[%s6] sm:$0x1]
    %v186 = vlaneseq
    %v187 = vshrl.u32 %v186, 7
    %v188 = vsub.s32 0, %v187
    %v189 = vrot.slane %v184, %v188
    %v195 = vunpack.c.l.b16 %v180
    %v196 = vunpack.c.l.b16 %v181
    %v197 = vunpack.c.l.b16 %v182
    %v198 = vunpack.c.l.b16 %v183
    %v199 = vpack.c.b16 %v196, %v195
    %v200 = vpack.c.b16 %v198, %v197
    %v204 = vsel %vm132, %v179, 0
    %206 = vmatprep.subr.bf16.mxu0 0
    %207 = vmatpush1.bf16.msra.mxu0 %v199
    %208 = vmatprep.subr.bf16.mxu0 0
    %209 = vmatpush1.bf16.msra.mxu0 %v200
    %210 = vmatprep.subr.bf16.mxu0 0
    %211 = vmatpush1.bf16.msra.mxu0 0
    %212 = vmatprep.subr.bf16.mxu0 0
    %213 = vmatpush1.bf16.msra.mxu0 0
    %214 = vmatprep.subr.bf16.mxu0 0
    %215 = vmatpush1.bf16.msra.mxu0 0
    %216 = vmatprep.subr.bf16.mxu0 0
    %217 = vmatpush1.bf16.msra.mxu0 0
    %218 = vmatprep.subr.bf16.mxu0 0
    %219 = vmatpush1.bf16.msra.mxu0 0
    %220 = vmatprep.subr.bf16.mxu0 0
    %221 = vmatpush1.bf16.msra.mxu0 0
    %222 = vmatprep.subr.bf16.mxu0 0
    %223 = vmatpush1.bf16.msra.mxu0 0
    %224 = vmatprep.subr.bf16.mxu0 0
    %225 = vmatpush1.bf16.msra.mxu0 0
    %226 = vmatprep.subr.bf16.mxu0 0
    %227 = vmatpush1.bf16.msra.mxu0 0
    %228 = vmatprep.subr.bf16.mxu0 0
    %229 = vmatpush1.bf16.msra.mxu0 0
    %230 = vmatprep.subr.bf16.mxu0 0
    %231 = vmatpush1.bf16.msra.mxu0 0
    %232 = vmatprep.subr.bf16.mxu0 0
    %233 = vmatpush1.bf16.msra.mxu0 0
    %234 = vmatprep.subr.bf16.mxu0 0
    %235 = vmatpush1.bf16.msra.mxu0 0
    %236 = vmatprep.subr.bf16.mxu0 0
    %237 = vmatpush1.bf16.msra.mxu0 0
    %238 = vmatprep.mubr.bf16.mxu0 0
    %239 = vmatmul.mubr.bf16.gmra.mrb[0].mxu0 %v204
    %v240 = vpop.f32.mrb[0].mxu0
    %v241 = vadd.f32 %v189, %v240
    %v242 = vpop.f32.mrb[0].mxu0
    %v243 = vpop.f32.mrb[0].mxu0
    %v244 = vadd.f32 %v189, %v243
    %v245 = vpop.f32.mrb[0].mxu0
    %246 = vdwg.mxu0
    %v247 = vld [vmem:[%s7] sm:$0x1]
    %v249 = vlaneseq
    %v250 = vshrl.u32 %v249, 7
    %v251 = vsub.s32 0, %v250
    %v252 = vrot.slane %v247, %v251
    %v254 = vmax.f32 %v241, %v252
    %v255 = vmax.f32 %v244, %v252
    %v256 = vld [vmem:[%s8] sm:$0x1]
    %v258 = vlaneseq
    %v259 = vshrl.u32 %v258, 7
    %v260 = vsub.s32 0, %v259
    %v261 = vrot.slane %v256, %v260
    %v263 = vmin.f32 %v254, %v261
    %v264 = vmin.f32 %v255, %v261
    %v265 = vpack.c.bf16 %v264, %v263
    %v267 = vunpack.c.l.b16 %v265
    %v268 = vunpack.c.h.b16 %v265
    %v269 = vpack.c.b16 %v267, %v267
    %v270 = vpack.c.b16 %v268, %v268
    %273 = vst [vmem:[#allocation5] sm:$0xf] %v269
    %274 = vst [vmem:[#allocation5 + $0x4] sm:$0xf] %v270
    // Predicated region
    $region42: #{tpu_custom_call.1} parent=1 // pred_check
      _
    $region43: #{tpu_custom_call.1} parent=1 // pred_check_branch
      %276 = sbr.rel (0) target = $region45
    $region44: #{tpu_custom_call.1} parent=1 // pred_region
      %s278 = ssub.s32 128, 128
      %279 = vsyncadd [#allocation4], %s278
      %s280 = sshll.u32 [#allocation5], 4
      %s281 = int_to_ptr.vmem [resolvable:$true] %s280
      %286 = dma.vmem_to_hbm [thread:$0]  %s281, 128, %s9, [#allocation4], 64, 64, 4
    $region45: #{tpu_custom_call.1} parent=1 // pred_fallthru
      _
    // Predicated region
    $region46: #{tpu_custom_call.1} parent=1 // pred_check
      _
    $region47: #{tpu_custom_call.1} parent=1 // pred_check_branch
      %288 = sbr.rel (0) target = $region49
    $region48: #{tpu_custom_call.1} parent=1 // pred_region
      %289 = dma.done [#allocation4], 128
    $region49: #{tpu_custom_call.1} parent=1 // pred_fallthru
      _
    %290 = vsyncpa [#allocation3], 1
    %291 = vsyncpa [#allocation4], 1

</llo_original>
